<compile_context>
chip_gen: v7x
topology: tpu7x:2x2x1
jax: 0.10.0
libtpu: 0.0.40
codegen_flags: <defaults>
</compile_context>

<pallas_src>
import math
from functools import partial

import jax
import jax.numpy as jnp
from jax import lax
from jax.experimental import pallas as pl
from jax.experimental.pallas import tpu as pltpu

NEG = -1e30

_VMEM_LIMIT_CACHE = None


def _vmem_limit_bytes():
    """~80% of physical VMEM (102 MiB on 128 MiB parts, ~51 MiB on v7x)."""
    global _VMEM_LIMIT_CACHE
    if _VMEM_LIMIT_CACHE is None:
        cap = 64 * 1024 * 1024
        try:
            info = pltpu.get_tpu_info()
            cap = int(getattr(info, "vmem_capacity_bytes", cap))
        except Exception:
            pass
        _VMEM_LIMIT_CACHE = int(cap * 4 // 5)
    return _VMEM_LIMIT_CACHE


def _spec(shape, index_map, mode=None):
    if mode is None:
        return pl.BlockSpec(shape, index_map)
    return pl.BlockSpec(shape, index_map, pipeline_mode=mode)


def _nn_pipeline_mode(nn_bytes, vmem_limit):
    # Drop to single-buffering for the big (N,N) blocks if double-buffering them
    # would eat more than ~1/3 of the VMEM budget (v7x headroom).
    return pl.Buffered(1) if 2 * nn_bytes > vmem_limit // 3 else None


# ----------------------------------------------------------------------------
# Kernel 1: batched feature transform  XW = X @ W (hoisted out of the per-graph
# grid; bias added inside the fused layer kernel). Inputs pre-cast to bf16.
# ----------------------------------------------------------------------------
def _feat_kernel(x_ref, w_ref, o_ref):
    o_ref[...] = jnp.dot(x_ref[...], w_ref[...], preferred_element_type=jnp.float32)


def feat_transform(x2d, w):
    M, Fin = x2d.shape
    Fout = w.shape[1]
    TM = min(256, ((M + 7) // 8) * 8)
    Mp = ((M + TM - 1) // TM) * TM
    xb = x2d.astype(jnp.bfloat16)
    if Mp != M:
        xb = jnp.pad(xb, ((0, Mp - M), (0, 0)))
    wb = w.astype(jnp.bfloat16)
    out = pl.pallas_call(
        _feat_kernel,
        out_shape=jax.ShapeDtypeStruct((Mp, Fout), jnp.float32),
        grid=(Mp // TM,),
        in_specs=[pl.BlockSpec((TM, Fin), lambda i: (i, 0)),
                  pl.BlockSpec((Fin, Fout), lambda i: (0, 0))],
        out_specs=pl.BlockSpec((TM, Fout), lambda i: (i, 0)),
        compiler_params=pltpu.CompilerParams(dimension_semantics=("parallel",)),
    )(xb, wb)
    return out[:M] if Mp != M else out


# ----------------------------------------------------------------------------
# Kernel 2: fused per-graph layer =
#   GCNConv (relu) -> gnn_intra_cluster GCNConv -> ASAP attention + LEConv fitness.
# A is loaded once per graph; h and x_pool never touch HBM.
# ----------------------------------------------------------------------------
def _asap_layer_kernel(a_ref, xw_ref, bc_ref, wic_ref, bic_ref,
                       mrow_ref, mcol_ref,
                       wqf_ref, batt_ref, waj_ref, w123_ref, b123_ref,
                       *rest, add_diag, emit_s, slope):
    if emit_s:
        out_ref, s_ref, fit_ref, xq_scr = rest
    else:
        out_ref, fit_ref, xq_scr = rest
        s_ref = None

    N = a_ref.shape[1]
    a = a_ref[0]                                      # (N, N)
    if add_diag:                                      # add self loops in-kernel
        ri = lax.broadcasted_iota(jnp.int32, (N, N), 0)
        ci = lax.broadcasted_iota(jnp.int32, (N, N), 1)
        a = a + jnp.where(ri == ci, 1.0, 0.0)

    mcol = mcol_ref[0]                                # (N, 1)

    # --- GCNConv: h = relu(D^-1/2 A D^-1/2 (X Wc) + bc) * mask -----------------
    deg = jnp.sum(a, axis=1, keepdims=True)
    dinv = jnp.where(deg > 0, lax.rsqrt(deg), 0.0)
    a_b = a.astype(jnp.bfloat16)
    xw = xw_ref[0]                                    # (N, H) = X @ Wc (prehoisted)
    h = dinv * jnp.dot(a_b, (dinv * xw).astype(jnp.bfloat16),
                       preferred_element_type=jnp.float32) + bc_ref[...]
    h = jnp.maximum(h, 0.0) * mcol

    # --- gnn_intra_cluster GCNConv (no relu): xp = D^-1/2 A D^-1/2 (h Wic) + bic
    hw = jnp.dot(h.astype(jnp.bfloat16), wic_ref[...],
                 preferred_element_type=jnp.float32)
    xp = (dinv * jnp.dot(a_b, (dinv * hw).astype(jnp.bfloat16),
                         preferred_element_type=jnp.float32) + bic_ref[...]) * mcol

    # --- X_q[i] = max over neighbors j of x_pool[j]  (bf16 select+max, f32 mask)
    xp_b = xp.astype(jnp.bfloat16)
    negb = jnp.asarray(NEG, dtype=jnp.bfloat16)
    TI = 8 if (N % 8 == 0 and N > 8) else N
    n_chunks = N // TI
    if n_chunks == 1:
        cand = jnp.where((a != 0.0)[:, :, None], xp_b[None, :, :], negb)
        xq = jnp.max(cand, axis=1).astype(jnp.float32)
    else:
        def _chunk(c, carry):
            i0 = pl.multiple_of(c * TI, TI)
            a_rows = a_ref[0, pl.ds(i0, TI), :]                       # (TI, N)
            if add_diag:
                rr = lax.broadcasted_iota(jnp.int32, (TI, N), 0) + i0
                cc = lax.broadcasted_iota(jnp.int32, (TI, N), 1)
                a_rows = a_rows + jnp.where(rr == cc, 1.0, 0.0)
            cand = jnp.where((a_rows != 0.0)[:, :, None], xp_b[None, :, :], negb)
            xq_scr[pl.ds(i0, TI), :] = jnp.max(cand, axis=1).astype(jnp.float32)
            return carry
        lax.fori_loop(0, n_chunks, _chunk, 0, unroll=min(n_chunks, 8))
        xq = xq_scr[...]
    xq = jnp.where(mcol > 0, xq, 0.0)                  # (N, H)

    # --- attention logits (Wq folded into attention vector outside the kernel)
    sc_i = jnp.dot(xq, wqf_ref[...], preferred_element_type=jnp.float32) + batt_ref[...]
    sc_j = jnp.dot(h, waj_ref[...], preferred_element_type=jnp.float32)
    logits = sc_i + jnp.transpose(sc_j)                                # (N, N)
    logits = jnp.where(logits > 0, logits, slope * logits)             # leaky_relu
    edge = a != 0.0
    logits = jnp.where(edge, logits, NEG)

    lmax = jnp.max(logits, axis=1, keepdims=True)
    e = jnp.where(edge, jnp.exp(logits - lmax), 0.0)
    den = jnp.maximum(jnp.sum(e, axis=1, keepdims=True), 1e-16)
    s = e / den                                        # exact softmax
    s_b = s.astype(jnp.bfloat16)

    out = jnp.dot(s_b, h.astype(jnp.bfloat16),
                  preferred_element_type=jnp.float32) * mcol           # (N, H)

    # --- LEConv fitness on binary edges; W1|W2|W3 fused into one (H,3) matmul
    edge_f = jnp.where(edge, 1.0, 0.0)
    degb = jnp.sum(edge_f, axis=1, keepdims=True)
    h123 = jnp.dot(out, w123_ref[...], preferred_element_type=jnp.float32) + b123_ref[...]
    agg = jnp.dot(edge_f.astype(jnp.bfloat16), h123[:, 0:1].astype(jnp.bfloat16),
                  preferred_element_type=jnp.float32)
    fit = jax.nn.sigmoid(degb * h123[:, 1:2] - agg + h123[:, 2:3]) * mcol

    out_ref[0] = out
    if s_ref is not None:
        s_ref[0] = s_b                                 # bf16 S output
    fit_ref[0] = jnp.transpose(fit)                    # lane-dense (1, N)


def asap_layer(adj, x, Wc, bc, pool_p, mask_row, mask_col, H, *, add_diag, emit_s):
    B, N, Fin = x.shape
    xw = feat_transform(x.reshape(B * N, Fin), Wc).reshape(B, N, H)

    p = pool_p
    # Fold linear layers once per call (exact algebra, tiny plain-JAX matmuls):
    #   sc_i = (xq @ Wq + bq) @ Wa[:H] + ba == xq @ (Wq @ Wa[:H]) + (bq @ Wa[:H] + ba)
    wq_fold = jnp.dot(p["Wq"], p["Wa"][:H])                           # (H, 1)
    b_att = jnp.dot(p["bq"], p["Wa"][:H]) + p["ba"]                   # (1, 1)
    wa_j = p["Wa"][H:]                                                # (H, 1)
    w123 = jnp.concatenate([p["W1"], p["W2"], p["W3"]], axis=1)       # (H, 3)
    b123 = jnp.concatenate([p["b1"], p["b2"], p["b3"]], axis=1)       # (1, 3)
    wic_b = p["Wic"].astype(jnp.bfloat16)

    vmem_limit = _vmem_limit_bytes()
    nn_bytes = N * N * 4 + (N * N * 2 if emit_s else 0)
    mode = _nn_pipeline_mode(nn_bytes, vmem_limit)

    spec_nn = _spec((1, N, N), lambda i: (i, 0, 0), mode)
    spec_nh = pl.BlockSpec((1, N, H), lambda i: (i, 0, 0))
    spec_mr = pl.BlockSpec((1, 1, N), lambda i: (i, 0, 0))
    spec_mc = pl.BlockSpec((1, N, 1), lambda i: (i, 0, 0))
    full2 = lambda shp: pl.BlockSpec(shp, lambda i: (0, 0))

    out_shapes = [jax.ShapeDtypeStruct((B, N, H), jnp.float32)]
    out_specs = [spec_nh]
    if emit_s:
        out_shapes.append(jax.ShapeDtypeStruct((B, N, N), jnp.bfloat16))
        out_specs.append(_spec((1, N, N), lambda i: (i, 0, 0), mode))
    out_shapes.append(jax.ShapeDtypeStruct((B, 1, N), jnp.float32))
    out_specs.append(spec_mr)

    res = pl.pallas_call(
        partial(_asap_layer_kernel, add_diag=add_diag, emit_s=emit_s, slope=0.2),
        out_shape=tuple(out_shapes),
        grid=(B,),
        in_specs=[spec_nn, spec_nh, full2((1, H)), full2((H, H)), full2((1, H)),
                  spec_mr, spec_mc,
                  full2((H, 1)), full2((1, 1)), full2((H, 1)),
                  full2((H, 3)), full2((1, 3))],
        out_specs=tuple(out_specs),
        scratch_shapes=[pltpu.VMEM((N, H), jnp.float32)],
        compiler_params=pltpu.CompilerParams(
            dimension_semantics=("parallel",),
            vmem_limit_bytes=vmem_limit),
    )(adj, xw, bc, wic_b, p["bic"], mask_row, mask_col,
      wq_fold, b_att, wa_j, w123, b123)

    if emit_s:
        out, s, fit = res
    else:
        out, fit = res
        s = None
    return out, s, fit


# ----------------------------------------------------------------------------
# Kernel 3: graph connectivity with in-kernel top-k row gather:
#   S_rows = onehot(perm) @ S ; E = S_rows A S_rows^T ; remove self loops ;
#   diag = new-cluster mask.  S stays bf16; no s_sel tensor in HBM.
# ----------------------------------------------------------------------------
def _connect_kernel(s_ref, a_ref, perm_ref, vm_ref, e_ref, *, add_diag):
    N = a_ref.shape[1]
    K = perm_ref.shape[2]
    s = s_ref[0]                                      # (N, N) bf16
    a = a_ref[0]                                      # (N, N) f32
    if add_diag:
        ri = lax.broadcasted_iota(jnp.int32, (N, N), 0)
        ci = lax.broadcasted_iota(jnp.int32, (N, N), 1)
        a = a + jnp.where(ri == ci, 1.0, 0.0)

    perm = perm_ref[0]                                # (1, K) int32
    nm = vm_ref[0]                                    # (1, K) new-cluster validity
    permc = jnp.transpose(perm)                       # (K, 1)
    nmc = jnp.transpose(nm)                           # (K, 1)

    # one-hot selection P[c, j] = (perm[c] == j) * valid[c]; row gather on the MXU
    colj = lax.broadcasted_iota(jnp.int32, (K, N), 1)
    p_sel = (jnp.where(colj == permc, 1.0, 0.0) * nmc).astype(jnp.bfloat16)  # (K, N)
    s_rows = jnp.dot(p_sel, s, preferred_element_type=jnp.float32
                     ).astype(jnp.bfloat16)                                   # (K, N)

    tmp = jnp.dot(s_rows, a.astype(jnp.bfloat16),
                  preferred_element_type=jnp.float32)                         # (K, N)
    e = lax.dot_general(tmp.astype(jnp.bfloat16), s_rows,
                        dimension_numbers=(((1,), (1,)), ((), ())),
                        preferred_element_type=jnp.float32)                   # (K, K)

    ri = lax.broadcasted_iota(jnp.int32, (K, K), 0)
    ci = lax.broadcasted_iota(jnp.int32, (K, K), 1)
    diag = ri == ci
    e = jnp.where(diag, 0.0, e)                       # remove_self_loops
    e = e + jnp.where(diag, nm, 0.0)                  # add_remaining_self_loops fill=1
    e_ref[0] = e


def connectivity(s, adj, perm_row, new_mask_row, *, add_diag):
    B, N, _ = adj.shape
    K = perm_row.shape[2]
    vmem_limit = _vmem_limit_bytes()
    mode = _nn_pipeline_mode(N * N * 4 + N * N * 2, vmem_limit)
    return pl.pallas_call(
        partial(_connect_kernel, add_diag=add_diag),
        out_shape=jax.ShapeDtypeStruct((B, K, K), jnp.float32),
        grid=(B,),
        in_specs=[_spec((1, N, N), lambda i: (i, 0, 0), mode),     # S (bf16)
                  _spec((1, N, N), lambda i: (i, 0, 0), mode),     # A (f32)
                  pl.BlockSpec((1, 1, K), lambda i: (i, 0, 0)),    # perm (int32)
                  pl.BlockSpec((1, 1, K), lambda i: (i, 0, 0))],   # new mask
        out_specs=pl.BlockSpec((1, K, K), lambda i: (i, 0, 0)),
        compiler_params=pltpu.CompilerParams(
            dimension_semantics=("parallel",),
            vmem_limit_bytes=vmem_limit),
    )(s, adj, perm_row, new_mask_row)


# ----------------------------------------------------------------------------
# Kernel 4: readout = cat(scatter_mean, scatter_max) over nodes, tiled over B
# ----------------------------------------------------------------------------
def _readout_kernel(x_ref, mr_ref, mc_ref, o_ref):
    x = x_ref[0]                                      # (N, H)
    mrow = mr_ref[0]                                  # (1, N)
    mcol = mc_ref[0]                                  # (N, 1)
    cnt = jnp.maximum(jnp.sum(mrow), 1.0)
    mean = jnp.sum(x * mcol, axis=0, keepdims=True) / cnt              # (1, H)
    mx = jnp.max(jnp.where(mcol > 0, x, NEG), axis=0, keepdims=True)   # (1, H)
    o_ref[0] = jnp.concatenate([mean, mx], axis=-1)


def readout(x, mask_row, mask_col):
    B, N, H = x.shape
    out = pl.pallas_call(
        _readout_kernel,
        out_shape=jax.ShapeDtypeStruct((B, 1, 2 * H), jnp.float32),
        grid=(B,),
        in_specs=[pl.BlockSpec((1, N, H), lambda i: (i, 0, 0)),
                  pl.BlockSpec((1, 1, N), lambda i: (i, 0, 0)),
                  pl.BlockSpec((1, N, 1), lambda i: (i, 0, 0))],
        out_specs=pl.BlockSpec((1, 1, 2 * H), lambda i: (i, 0, 0)),
        compiler_params=pltpu.CompilerParams(dimension_semantics=("parallel",)),
    )(x, mask_row, mask_col)
    return out[:, 0, :]


# ----------------------------------------------------------------------------
# Kernel 5: multi-task heads, first layer fused across tasks
#   h = relu(xs @ [W1_0 | ... | W1_{T-1}]), then per-task Linear + log_softmax
# ----------------------------------------------------------------------------
def _head_kernel(xs_ref, w1_ref, b1_ref, w2_ref, b2_ref, o_ref, *, T, H):
    xs = xs_ref[...]                                  # (B, 2H)
    h = jnp.maximum(
        jnp.dot(xs, w1_ref[...], preferred_element_type=jnp.float32) + b1_ref[...], 0.0)
    for t in range(T):                                # T is a trace-time constant
        ht = h[:, t * H:(t + 1) * H]                  # (B, H) static slice
        logits = jnp.dot(ht, w2_ref[t], preferred_element_type=jnp.float32) + b2_ref[t]
        z = logits - jnp.max(logits, axis=-1, keepdims=True)
        o_ref[t] = z - jnp.log(jnp.sum(jnp.exp(z), axis=-1, keepdims=True))


def heads(xs, w1, b1, w2, b2):
    T, twoH, H = w1.shape
    C = w2.shape[-1]
    w1all = jnp.transpose(w1, (1, 0, 2)).reshape(twoH, T * H)
    b1all = jnp.transpose(b1, (1, 0, 2)).reshape(1, T * H)
    return pl.pallas_call(
        partial(_head_kernel, T=T, H=H),
        out_shape=jax.ShapeDtypeStruct((T, xs.shape[0], C), jnp.float32),
    )(xs, w1all, b1all, w2, b2)


# ----------------------------------------------------------------------------
# Glue (plain JAX): per-graph top-k node selection + pooled-feature gather.
# TODO(synk): data-dependent top-k has no clean Pallas equivalent; kept in JAX.
# The S-row gather now happens inside the connectivity kernel (perm is passed in).
# ----------------------------------------------------------------------------
def topk_pool(out, fit_row, mask_row, n_valid, ratio):
    B, N, H = out.shape
    k = int(math.ceil(ratio * n_valid))               # trace-time constant
    kp = ((k + 127) // 128) * 128                     # lane-dense pooled size
    kp = max(8, min(kp, ((N + 7) // 8) * 8))          # never exceed graph size

    fitv = jnp.where(mask_row[:, 0, :] > 0, fit_row[:, 0, :], -jnp.inf)   # (B, N)
    vals, perm = lax.top_k(fitv, k)                                       # (B, k)
    valid = jnp.take_along_axis(mask_row[:, 0, :], perm, axis=1)          # (B, k)
    vals = jnp.where(valid > 0, vals, 0.0)            # avoid NaN with < k valid nodes
    x_sel = jnp.take_along_axis(out, perm[:, :, None], axis=1) * vals[:, :, None]

    pad = kp - k
    if pad:
        x_sel = jnp.pad(x_sel, ((0, 0), (0, pad), (0, 0)))
        perm = jnp.pad(perm, ((0, 0), (0, pad)))
        valid = jnp.pad(valid, ((0, 0), (0, pad)))
    perm_row = perm[:, None, :].astype(jnp.int32)     # (B, 1, kp)
    new_mask_row = valid[:, None, :]                  # (B, 1, kp) lane-dense
    new_mask_col = valid[:, :, None]                  # (B, kp, 1)
    return x_sel, perm_row, new_mask_row, new_mask_col, k


def init_params(key, F0, H, C, T):
    keys = iter(jax.random.split(key, 64))
    g = lambda shape, s=0.3: s * jax.random.normal(next(keys), shape, jnp.float32)

    def pool_params():
        return dict(Wq=g((H, H)), bq=g((1, H), 0.05),
                    Wa=g((2 * H, 1)), ba=g((1, 1), 0.05),
                    W1=g((H, 1)), b1=g((1, 1), 0.05),
                    W2=g((H, 1)), b2=g((1, 1), 0.05),
                    W3=g((H, 1)), b3=g((1, 1), 0.05),
                    Wic=g((H, H)), bic=g((1, H), 0.05))

    return dict(
        Wc1=g((F0, H)), bc1=g((1, H), 0.05),
        Wc2=g((H, H)), bc2=g((1, H), 0.05),
        pool1=pool_params(), pool2=pool_params(),
        Hw1=g((T, 2 * H, H)), Hb1=g((T, 1, H), 0.05),
        Hw2=g((T, H, C)), Hb2=g((T, 1, C), 0.05))


def asap_pool_forward(x0, adj, mask0_row, params, H, ratio=0.8):
    B, N, _ = adj.shape
    mask0_col = jnp.transpose(mask0_row, (0, 2, 1))

    # --- layer 1: conv1 + pool1 (single fused per-graph kernel) ---
    p1 = params["pool1"]
    out1, s1, fit1 = asap_layer(adj, x0, params["Wc1"], params["bc1"], p1,
                                mask0_row, mask0_col, H,
                                add_diag=True, emit_s=True)
    x1, perm1, mask1_row, mask1_col, k1 = topk_pool(out1, fit1, mask0_row, N, ratio)
    adj1 = connectivity(s1, adj, perm1, mask1_row, add_diag=True)   # (B, kp, kp)
    xs = readout(x1, mask1_row, mask1_col)

    # --- layer 2: convs[0] + pools[0] (S output and connectivity not needed) ---
    p2 = params["pool2"]
    out2, _, fit2 = asap_layer(adj1, x1, params["Wc2"], params["bc2"], p2,
                               mask1_row, mask1_col, H,
                               add_diag=False, emit_s=False)
    x2, _, mask2_row, mask2_col, _ = topk_pool(out2, fit2, mask1_row, k1, ratio)
    xs = xs + readout(x2, mask2_row, mask2_col)

    # --- per-task heads ---
    pred = heads(xs, params["Hw1"], params["Hb1"], params["Hw2"], params["Hb2"])  # (T,B,C)
    return jnp.transpose(pred, (1, 2, 0))             # (B, num_classes, num_tasks)


if __name__ == "__main__":
    B, N, F0, H, C, T = 2, 8, 8, 32, 4, 2             # 2 graphs, 8 nodes each, hidden=32
    key = jax.random.PRNGKey(0)
    k_feat, k_adj, k_par = jax.random.split(key, 3)

    x0 = jax.random.normal(k_feat, (B, N, F0), jnp.float32)

    u = jax.random.uniform(k_adj, (B, N, N))
    adj = (u < 0.35).astype(jnp.float32)
    adj = jnp.maximum(adj, jnp.transpose(adj, (0, 2, 1)))                 # symmetric
    adj = adj * (1.0 - jnp.eye(N, dtype=jnp.float32)[None])               # no self loops
    ring = jnp.zeros((N, N), jnp.float32).at[jnp.arange(N), (jnp.arange(N) + 1) % N].set(1.0)
    ring = jnp.maximum(ring, ring.T)[None]
    adj = jnp.maximum(adj, ring)                                          # connected graphs

    mask0 = jnp.ones((B, 1, N), jnp.float32)          # lane-dense node-validity mask
    params = init_params(k_par, F0, H, C, T)

    pred = asap_pool_forward(x0, adj, mask0, params, H, ratio=0.8)        # (B, C, T)
    jax.block_until_ready(pred)
    assert pred.shape == (B, C, T)
    print("KERNEL_OK")
</pallas_src>

<mosaic_0001>
module attributes {stable_mosaic.version = 11 : i64} {
  func.func @_feat_kernel(%arg0: i32, %arg1: memref<16x8xbf16, #tpu.memory_space<vmem>>, %arg2: memref<8x32xbf16, #tpu.memory_space<vmem>>, %arg3: memref<16x32xf32, #tpu.memory_space<vmem>>) attributes {dimension_semantics = [#tpu.dimension_semantics<parallel>], iteration_bounds = array<i64: 1>, scalar_prefetch = 0 : i64, scratch_operands = 0 : i64, tpu.core_type = #tpu.core_type<tc>, window_params = [{transform_indices = @transform_0, window_bounds = array<i64: 16, 8>}, {pipeline_mode = #tpu.pipeline_mode<synchronous>, transform_indices = @transform_1, window_bounds = array<i64: 8, 32>}, {transform_indices = @transform_2, window_bounds = array<i64: 16, 32>}]} {
    %c0 = arith.constant 0 : index
    %c0_0 = arith.constant 0 : index
    %0 = vector.load %arg1[%c0, %c0_0] : memref<16x8xbf16, #tpu.memory_space<vmem>>, vector<16x8xbf16>
    %c0_1 = arith.constant 0 : index
    %c0_2 = arith.constant 0 : index
    %1 = vector.load %arg2[%c0_1, %c0_2] : memref<8x32xbf16, #tpu.memory_space<vmem>>, vector<8x32xbf16>
    %cst = arith.constant dense<0.000000e+00> : vector<16x32xf32>
    %2 = tpu.matmul %0, %1, %cst {dimension_numbers = #tpu.dot_dimension_numbers<[1], [0], [0], [1], [0, 0, 1, 1], [], []>} : vector<16x8xbf16>, vector<8x32xbf16>, vector<16x32xf32> -> vector<16x32xf32>
    %c0_3 = arith.constant 0 : index
    %c0_4 = arith.constant 0 : index
    %3 = vector.load %arg3[%c0_3, %c0_4] : memref<16x32xf32, #tpu.memory_space<vmem>>, vector<16x32xf32>
    tpu.vector_store %arg3[%c0_3, %c0_4], %2 {strides = array<i32>} : memref<16x32xf32, #tpu.memory_space<vmem>>, vector<16x32xf32>,
    return
  }
  func.func @transform_0(%arg0: i32) -> (i32, i32) {
    %c0_i32 = arith.constant 0 : i32
    %c0_i32_0 = arith.constant 0 : i32
    return %arg0, %c0_i32 : i32, i32
  }
  func.func @transform_1(%arg0: i32) -> (i32, i32) {
    %c0_i32 = arith.constant 0 : i32
    %c0_i32_0 = arith.constant 0 : i32
    %c0_i32_1 = arith.constant 0 : i32
    return %c0_i32, %c0_i32_0 : i32, i32
  }
  func.func @transform_2(%arg0: i32) -> (i32, i32) {
    %c0_i32 = arith.constant 0 : i32
    %c0_i32_0 = arith.constant 0 : i32
    return %arg0, %c0_i32 : i32, i32
  }
}

</mosaic_0001>

<llo_original>
// kernel: tpu_custom_call.1
$region0: #{tpu_custom_call.1}
  #allocation0 [shape = 'u32[]', space=smem, size = 0x4, offset = 0x4, fixed_abs, tag = 'smem constant byte address 0x4 - core index']
  #allocation1 [shape = 'u32[144,128]{1,0:T(1,128)}', space=vmem, size = 0x12000, scoped, tag = 'internal scratch']
  %s0 = inlined_call_operand.vmem [shape: bf16[16,8], index: 0, kind: input, shape index: {}]
  %s1 = inlined_call_operand.vmem [shape: bf16[8,32], index: 1, kind: input, shape index: {}]
  %s2 = inlined_call_operand.hbm [shape: f32[16,32], index: 2, kind: output, shape index: {}]
  %s3 = sld [smem:[#allocation0]]
  $region18: #{tpu_custom_call.1} parent=0
    _
  %s5 = ssub.s32 1, %s3
  %s6 = scalar_select 0, %s5, %s3
  $region1: #{tpu_custom_call.1} parent=0
    #allocation2 [shape = 'u8[8192]{0}', space=vmem, size = 0x2000, scoped, tag = 'output window, operand 0, single buffered']
    #allocation3 [shape = 's32[1]{0}', space=sflag, size = 0x4, scoped, tag = 'scoped memory for tpu_custom_call.1']
    %7 = vsyncpa [#allocation3], 0
    // Predicated region
    $region2: #{tpu_custom_call.1} parent=1 // pred_check
      _
    $region3: #{tpu_custom_call.1} parent=1 // pred_check_branch
      %9 = sbr.rel (0) target = $region5
    $region4: #{tpu_custom_call.1} parent=1 // pred_region
      _
    $region5: #{tpu_custom_call.1} parent=1 // pred_fallthru
      _
    // Predicated region
    $region6: #{tpu_custom_call.1} parent=1 // pred_check
      _
    $region7: #{tpu_custom_call.1} parent=1 // pred_check_branch
      %11 = sbr.rel (0) target = $region9
    $region8: #{tpu_custom_call.1} parent=1 // pred_region
      _
    $region9: #{tpu_custom_call.1} parent=1 // pred_fallthru
      _
    %v13 = vld [vmem:[%s0] sm:$0xf]
    %v14 = vld [vmem:[%s0 + $0x4] sm:$0xf]
    %v15 = vld [vmem:[%s1] sm:$0xf]
    %v18 = vunpack.c.l.b16 %v13
    %v19 = vunpack.c.l.b16 %v14
    %v20 = vpack.c.b16 %v19, %v18
    %vm21 = vcmask 64512
    %v23 = vsel %vm21, %v20, 0
    %vm25 = vcmask 1043456
    %v27 = vsel %vm25, %v15, 0
    %29 = vmatprep.subr.bf16.mxu0 0
    %30 = vmatpush1.bf16.msra.mxu0 %v27
    %31 = vmatprep.subr.bf16.mxu0 0
    %32 = vmatpush1.bf16.msra.mxu0 0
    %33 = vmatprep.subr.bf16.mxu0 0
    %34 = vmatpush1.bf16.msra.mxu0 0
    %35 = vmatprep.subr.bf16.mxu0 0
    %36 = vmatpush1.bf16.msra.mxu0 0
    %37 = vmatprep.subr.bf16.mxu0 0
    %38 = vmatpush1.bf16.msra.mxu0 0
    %39 = vmatprep.subr.bf16.mxu0 0
    %40 = vmatpush1.bf16.msra.mxu0 0
    %41 = vmatprep.subr.bf16.mxu0 0
    %42 = vmatpush1.bf16.msra.mxu0 0
    %43 = vmatprep.subr.bf16.mxu0 0
    %44 = vmatpush1.bf16.msra.mxu0 0
    %45 = vmatprep.subr.bf16.mxu0 0
    %46 = vmatpush1.bf16.msra.mxu0 0
    %47 = vmatprep.subr.bf16.mxu0 0
    %48 = vmatpush1.bf16.msra.mxu0 0
    %49 = vmatprep.subr.bf16.mxu0 0
    %50 = vmatpush1.bf16.msra.mxu0 0
    %51 = vmatprep.subr.bf16.mxu0 0
    %52 = vmatpush1.bf16.msra.mxu0 0
    %53 = vmatprep.subr.bf16.mxu0 0
    %54 = vmatpush1.bf16.msra.mxu0 0
    %55 = vmatprep.subr.bf16.mxu0 0
    %56 = vmatpush1.bf16.msra.mxu0 0
    %57 = vmatprep.subr.bf16.mxu0 0
    %58 = vmatpush1.bf16.msra.mxu0 0
    %59 = vmatprep.subr.bf16.mxu0 0
    %60 = vmatpush1.bf16.msra.mxu0 0
    %61 = vmatprep.mubr.bf16.mxu0 0
    %62 = vmatmul.mubr.bf16.gmra.mrb[0].mxu0 %v23
    %v63 = vpop.f32.mrb[0].mxu0
    %v64 = vadd.f32 0.0, %v63
    %v65 = vpop.f32.mrb[0].mxu0
    %v66 = vpop.f32.mrb[0].mxu0
    %v67 = vadd.f32 0.0, %v66
    %v68 = vpop.f32.mrb[0].mxu0
    %69 = vdwg.mxu0
    %vm70 = vcmask 261120
    %71 = vst.msk [vmem:[#allocation2] sm:$0xff] %vm70, %v64
    %72 = vst.msk [vmem:[#allocation2 + $0x8] sm:$0xff] %vm70, %v67
    // Predicated region
    $region10: #{tpu_custom_call.1} parent=1 // pred_check
      _
    $region11: #{tpu_custom_call.1} parent=1 // pred_check_branch
      %74 = sbr.rel (0) target = $region13
    $region12: #{tpu_custom_call.1} parent=1 // pred_region
      %s76 = ssub.s32 256, 256
      %77 = vsyncadd [#allocation3], %s76
      %s78 = sshll.u32 [#allocation2], 4
      %s79 = int_to_ptr.vmem [resolvable:$true] %s78
      %84 = dma.vmem_to_hbm [thread:$0]  %s79, 256, %s2, [#allocation3], 128, 128, 8
    $region13: #{tpu_custom_call.1} parent=1 // pred_fallthru
      _
    // Predicated region
    $region14: #{tpu_custom_call.1} parent=1 // pred_check
      _
    $region15: #{tpu_custom_call.1} parent=1 // pred_check_branch
      %86 = sbr.rel (0) target = $region17
    $region16: #{tpu_custom_call.1} parent=1 // pred_region
      %87 = dma.done [#allocation3], 256
    $region17: #{tpu_custom_call.1} parent=1 // pred_fallthru
      _
    %88 = vsyncpa [#allocation3], 1

</llo_original>
